<compile_context>
chip_gen: v5e
topology: v5e:2x2
jax: 0.10.0
libtpu: 0.0.40
codegen_flags: <defaults>
</compile_context>

<pallas_src>
import functools

import jax
import jax.numpy as jnp
from jax.experimental import pallas as pl
from jax.experimental.pallas import tpu as pltpu

# Hidden sizes fixed by the module definition, and their lane-padded versions.
H1, H2, H3 = 305, 64, 69
H1P, H2P, H3P = 384, 128, 128
LANE = 128

# Batch-tiling knobs.
SMALL_BATCH = 256     # single grid step up to this many (padded) rows
MAX_TILE = 1024       # cap per-step tile (per-step working set stays < ~5 MiB)


def _round_up(x, m):
    return (x + m - 1) // m * m


def _ceil_div(a, b):
    return -(-a // b)


def _choose_tiles(batch):
    """Pick (tile_rows, n_tiles) from the (static) batch size."""
    bp = _round_up(batch, 16)            # sublane-align only; waste < 16 rows
    if bp <= SMALL_BATCH:
        n_tiles = 1                      # small batch: one step, min latency
    else:
        # >= 2 balanced steps so v7x's 2nd TensorCore is used; tiles <= 1024.
        n_tiles = max(2, _ceil_div(bp, MAX_TILE))
    tb = _round_up(_ceil_div(bp, n_tiles), 16)
    return tb, n_tiles


def nnwd_kernel(x_ref,
                w1_ref, b1_ref,
                w2_ref, b2_ref,
                w3_ref, b3_ref,
                w4_ref, b4_ref,
                o_ref):
    compute_dtype = w1_ref.dtype
    # In-kernel cast (VPU op hidden under MXU) — x stays f32 in HBM.
    x = x_ref[...].astype(compute_dtype)

    # fc1 + relu   (f32 MXU accumulate; bias/ReLU in f32 — v5e VPU has no bf16)
    h = jnp.dot(x, w1_ref[...], preferred_element_type=jnp.float32)
    h = jnp.maximum(h + b1_ref[...], 0.0)

    # fc2 + relu
    h = jnp.dot(h.astype(compute_dtype), w2_ref[...],
                preferred_element_type=jnp.float32)
    h = jnp.maximum(h + b2_ref[...], 0.0)

    # dropout (eval mode -> identity)

    # fc3 + relu
    h = jnp.dot(h.astype(compute_dtype), w3_ref[...],
                preferred_element_type=jnp.float32)
    h = jnp.maximum(h + b3_ref[...], 0.0)

    # fc4 (no activation)
    out = jnp.dot(h.astype(compute_dtype), w4_ref[...],
                  preferred_element_type=jnp.float32)
    out = out + b4_ref[...]

    o_ref[...] = out.astype(o_ref.dtype)


@functools.partial(jax.jit, static_argnames=("out_dim",))
def nnwd_forward(x, padded_params, out_dim):
    """x: [B, input_dim] f32. padded_params: lane-padded params (see pad_params)."""
    (w1, b1, w2, b2, w3, b3, w4, b4) = padded_params
    B, in_dim = x.shape
    out_p = w4.shape[1]

    tb, n_tiles = _choose_tiles(B)
    Bp = tb * n_tiles
    if Bp != B:
        x = jnp.pad(x, ((0, Bp - B), (0, 0)))
    # NOTE: no wrapper-side astype — the kernel casts the x tile itself.

    # Weights/biases: same block every grid step -> stay VMEM-resident.
    resident = lambda arr: pl.BlockSpec(arr.shape, lambda i: (0, 0))

    out = pl.pallas_call(
        nnwd_kernel,
        out_shape=jax.ShapeDtypeStruct((Bp, out_p), jnp.float32),
        grid_spec=pltpu.PrefetchScalarGridSpec(
            num_scalar_prefetch=0,
            grid=(n_tiles,),
            in_specs=[
                pl.BlockSpec((tb, in_dim), lambda i: (i, 0)),
                resident(w1), resident(b1),
                resident(w2), resident(b2),
                resident(w3), resident(b3),
                resident(w4), resident(b4),
            ],
            out_specs=pl.BlockSpec((tb, out_p), lambda i: (i, 0)),
        ),
        compiler_params=pltpu.CompilerParams(
            dimension_semantics=("parallel",)),  # v7x: shard batch across 2 TCs
    )(x, w1, b1, w2, b2, w3, b3, w4, b4)

    return out[:B, :out_dim]


def init_params(key, input_dim, output_dim):
    """Deterministic synthetic parameters (Kaiming-uniform-ish scaling)."""
    def linear(k, fan_in, fan_out):
        kw, kb = jax.random.split(k)
        bound = 1.0 / jnp.sqrt(fan_in)
        # Stored as (in, out), i.e. already transposed vs PyTorch's (out, in).
        w = jax.random.uniform(kw, (fan_in, fan_out), jnp.float32, -bound, bound)
        b = jax.random.uniform(kb, (1, fan_out), jnp.float32, -bound, bound)
        return w, b

    k1, k2, k3, k4 = jax.random.split(key, 4)
    w1, b1 = linear(k1, input_dim, H1)
    w2, b2 = linear(k2, H1, H2)
    w3, b3 = linear(k3, H2, H3)
    w4, b4 = linear(k4, H3, output_dim)
    return (w1, b1, w2, b2, w3, b3, w4, b4)


def pad_params(params, compute_dtype=jnp.bfloat16):
    """Zero-pad feature dims to 128-multiples. Padded biases are exactly 0, so
    ReLU of padded lanes is 0 and the math is unchanged after slicing.

    compute_dtype defaults to bf16: the MXU is bf16-native on v5e/v6e/v7x, so
    bf16 weights halve weight DMA bytes and avoid multi-pass f32 matmuls.
    Pass jnp.float32 for bit-exact eval-mode semantics."""
    (w1, b1, w2, b2, w3, b3, w4, b4) = params
    in_dim = w1.shape[0]
    out_p = _round_up(w4.shape[1], LANE)

    def pad_w(w, rows, cols):
        r, c = w.shape
        return jnp.pad(w, ((0, rows - r), (0, cols - c))).astype(compute_dtype)

    def pad_b(b, cols):
        # Biases stay f32 (bias-add / ReLU run in f32 on the VPU).
        return jnp.pad(b, ((0, 0), (0, cols - b.shape[1]))).astype(jnp.float32)

    return (
        pad_w(w1, in_dim, H1P), pad_b(b1, H1P),
        pad_w(w2, H1P, H2P),    pad_b(b2, H2P),
        pad_w(w3, H2P, H3P),    pad_b(b3, H3P),
        pad_w(w4, H3P, out_p),  pad_b(b4, out_p),
    )


def reference_forward(x, params):
    (w1, b1, w2, b2, w3, b3, w4, b4) = params
    h = jax.nn.relu(x @ w1 + b1)
    h = jax.nn.relu(h @ w2 + b2)
    h = jax.nn.relu(h @ w3 + b3)
    return h @ w4 + b4


if __name__ == "__main__":
    input_dim = 32
    output_dim = 10

    key = jax.random.PRNGKey(0)
    kx1, kx2, kp = jax.random.split(key, 3)
    params = init_params(kp, input_dim, output_dim)
    params_f32 = pad_params(params, jnp.float32)
    params_bf16 = pad_params(params)  # bf16 default

    # --- Small batch (single grid step) ---
    batch = 8
    x = jax.random.normal(kx1, (batch, input_dim), jnp.float32)
    ref = reference_forward(x, params)

    # f32 path: exact semantics of the (eval-mode) PyTorch module.
    out_f32 = jax.block_until_ready(nnwd_forward(x, params_f32, output_dim))
    assert out_f32.shape == (batch, output_dim)
    assert jnp.allclose(out_f32, ref, atol=1e-4, rtol=1e-4), "f32 mismatch vs reference"

    # bf16-weights default path (f32 accumulate): looser tolerance.
    out_bf16 = jax.block_until_ready(nnwd_forward(x, params_bf16, output_dim))
    assert out_bf16.shape == (batch, output_dim)
    assert jnp.allclose(out_bf16, ref, atol=1e-1, rtol=1e-1), "bf16 mismatch vs reference"

    # --- Larger batch (>=2 grid steps, non-tile-multiple -> padded rows) ---
    batch2 = 260
    x2 = jax.random.normal(kx2, (batch2, input_dim), jnp.float32)
    ref2 = reference_forward(x2, params)

    out2_f32 = jax.block_until_ready(nnwd_forward(x2, params_f32, output_dim))
    assert out2_f32.shape == (batch2, output_dim)
    assert jnp.allclose(out2_f32, ref2, atol=1e-4, rtol=1e-4), "f32 multi-tile mismatch"

    out2_bf16 = jax.block_until_ready(nnwd_forward(x2, params_bf16, output_dim))
    assert out2_bf16.shape == (batch2, output_dim)
    assert jnp.allclose(out2_bf16, ref2, atol=1e-1, rtol=1e-1), "bf16 multi-tile mismatch"

    print("KERNEL_OK")
</pallas_src>

<mosaic_0001>
module attributes {stable_mosaic.version = 11 : i64} {
  func.func @nnwd_kernel(%arg0: i32, %arg1: memref<16x32xf32, #tpu.memory_space<vmem>>, %arg2: memref<32x384xf32, #tpu.memory_space<vmem>>, %arg3: memref<1x384xf32, #tpu.memory_space<vmem>>, %arg4: memref<384x128xf32, #tpu.memory_space<vmem>>, %arg5: memref<1x128xf32, #tpu.memory_space<vmem>>, %arg6: memref<128x128xf32, #tpu.memory_space<vmem>>, %arg7: memref<1x128xf32, #tpu.memory_space<vmem>>, %arg8: memref<128x128xf32, #tpu.memory_space<vmem>>, %arg9: memref<1x128xf32, #tpu.memory_space<vmem>>, %arg10: memref<16x128xf32, #tpu.memory_space<vmem>>) attributes {dimension_semantics = [#tpu.dimension_semantics<parallel>], iteration_bounds = array<i64: 1>, scalar_prefetch = 0 : i64, scratch_operands = 0 : i64, tpu.core_type = #tpu.core_type<tc>, window_params = [{transform_indices = @transform_0, window_bounds = array<i64: 16, 32>}, {pipeline_mode = #tpu.pipeline_mode<synchronous>, transform_indices = @transform_1, window_bounds = array<i64: 32, 384>}, {pipeline_mode = #tpu.pipeline_mode<synchronous>, transform_indices = @transform_2, window_bounds = array<i64: 1, 384>}, {pipeline_mode = #tpu.pipeline_mode<synchronous>, transform_indices = @transform_3, window_bounds = array<i64: 384, 128>}, {pipeline_mode = #tpu.pipeline_mode<synchronous>, transform_indices = @transform_4, window_bounds = array<i64: 1, 128>}, {pipeline_mode = #tpu.pipeline_mode<synchronous>, transform_indices = @transform_5, window_bounds = array<i64: 128, 128>}, {pipeline_mode = #tpu.pipeline_mode<synchronous>, transform_indices = @transform_6, window_bounds = array<i64: 1, 128>}, {pipeline_mode = #tpu.pipeline_mode<synchronous>, transform_indices = @transform_7, window_bounds = array<i64: 128, 128>}, {pipeline_mode = #tpu.pipeline_mode<synchronous>, transform_indices = @transform_8, window_bounds = array<i64: 1, 128>}, {transform_indices = @transform_9, window_bounds = array<i64: 16, 128>}]} {
    %c0 = arith.constant 0 : index
    %c0_0 = arith.constant 0 : index
    %0 = vector.load %arg1[%c0, %c0_0] : memref<16x32xf32, #tpu.memory_space<vmem>>, vector<16x32xf32>
    %c0_1 = arith.constant 0 : index
    %c0_2 = arith.constant 0 : index
    %1 = vector.load %arg2[%c0_1, %c0_2] : memref<32x384xf32, #tpu.memory_space<vmem>>, vector<32x384xf32>
    %cst = arith.constant dense<0.000000e+00> : vector<16x384xf32>
    %2 = tpu.matmul %0, %1, %cst {dimension_numbers = #tpu.dot_dimension_numbers<[1], [0], [0], [1], [0, 0, 1, 1], [], []>} : vector<16x32xf32>, vector<32x384xf32>, vector<16x384xf32> -> vector<16x384xf32>
    %c0_3 = arith.constant 0 : index
    %c0_4 = arith.constant 0 : index
    %3 = vector.load %arg3[%c0_3, %c0_4] : memref<1x384xf32, #tpu.memory_space<vmem>>, vector<1x384xf32>
    %4 = vector.broadcast %3 : vector<1x384xf32> to vector<16x384xf32>
    %5 = arith.addf %2, %4 : vector<16x384xf32>
    %cst_5 = arith.constant 0.000000e+00 : f32
    %6 = vector.broadcast %cst_5 : f32 to vector<16x384xf32>
    %7 = arith.maximumf %5, %6 : vector<16x384xf32>
    %c0_6 = arith.constant 0 : index
    %c0_7 = arith.constant 0 : index
    %8 = vector.load %arg4[%c0_6, %c0_7] : memref<384x128xf32, #tpu.memory_space<vmem>>, vector<384x128xf32>
    %cst_8 = arith.constant dense<0.000000e+00> : vector<16x128xf32>
    %9 = tpu.matmul %7, %8, %cst_8 {dimension_numbers = #tpu.dot_dimension_numbers<[1], [0], [0], [1], [0, 0, 1, 1], [], []>} : vector<16x384xf32>, vector<384x128xf32>, vector<16x128xf32> -> vector<16x128xf32>
    %c0_9 = arith.constant 0 : index
    %c0_10 = arith.constant 0 : index
    %10 = vector.load %arg5[%c0_9, %c0_10] : memref<1x128xf32, #tpu.memory_space<vmem>>, vector<1x128xf32>
    %11 = vector.broadcast %10 : vector<1x128xf32> to vector<16x128xf32>
    %12 = arith.addf %9, %11 : vector<16x128xf32>
    %cst_11 = arith.constant 0.000000e+00 : f32
    %13 = vector.broadcast %cst_11 : f32 to vector<16x128xf32>
    %14 = arith.maximumf %12, %13 : vector<16x128xf32>
    %c0_12 = arith.constant 0 : index
    %c0_13 = arith.constant 0 : index
    %15 = vector.load %arg6[%c0_12, %c0_13] : memref<128x128xf32, #tpu.memory_space<vmem>>, vector<128x128xf32>
    %cst_14 = arith.constant dense<0.000000e+00> : vector<16x128xf32>
    %16 = tpu.matmul %14, %15, %cst_14 {dimension_numbers = #tpu.dot_dimension_numbers<[1], [0], [0], [1], [0, 0, 1, 1], [], []>} : vector<16x128xf32>, vector<128x128xf32>, vector<16x128xf32> -> vector<16x128xf32>
    %c0_15 = arith.constant 0 : index
    %c0_16 = arith.constant 0 : index
    %17 = vector.load %arg7[%c0_15, %c0_16] : memref<1x128xf32, #tpu.memory_space<vmem>>, vector<1x128xf32>
    %18 = vector.broadcast %17 : vector<1x128xf32> to vector<16x128xf32>
    %19 = arith.addf %16, %18 : vector<16x128xf32>
    %cst_17 = arith.constant 0.000000e+00 : f32
    %20 = vector.broadcast %cst_17 : f32 to vector<16x128xf32>
    %21 = arith.maximumf %19, %20 : vector<16x128xf32>
    %c0_18 = arith.constant 0 : index
    %c0_19 = arith.constant 0 : index
    %22 = vector.load %arg8[%c0_18, %c0_19] : memref<128x128xf32, #tpu.memory_space<vmem>>, vector<128x128xf32>
    %cst_20 = arith.constant dense<0.000000e+00> : vector<16x128xf32>
    %23 = tpu.matmul %21, %22, %cst_20 {dimension_numbers = #tpu.dot_dimension_numbers<[1], [0], [0], [1], [0, 0, 1, 1], [], []>} : vector<16x128xf32>, vector<128x128xf32>, vector<16x128xf32> -> vector<16x128xf32>
    %c0_21 = arith.constant 0 : index
    %c0_22 = arith.constant 0 : index
    %24 = vector.load %arg9[%c0_21, %c0_22] : memref<1x128xf32, #tpu.memory_space<vmem>>, vector<1x128xf32>
    %25 = vector.broadcast %24 : vector<1x128xf32> to vector<16x128xf32>
    %26 = arith.addf %23, %25 : vector<16x128xf32>
    %c0_23 = arith.constant 0 : index
    %c0_24 = arith.constant 0 : index
    %27 = vector.load %arg10[%c0_23, %c0_24] : memref<16x128xf32, #tpu.memory_space<vmem>>, vector<16x128xf32>
    tpu.vector_store %arg10[%c0_23, %c0_24], %26 {strides = array<i32>} : memref<16x128xf32, #tpu.memory_space<vmem>>, vector<16x128xf32>,
    return
  }
  func.func @transform_0(%arg0: i32) -> (i32, i32) {
    %c0_i32 = arith.constant 0 : i32
    %c0_i32_0 = arith.constant 0 : i32
    return %arg0, %c0_i32 : i32, i32
  }
  func.func @transform_1(%arg0: i32) -> (i32, i32) {
    %c0_i32 = arith.constant 0 : i32
    %c0_i32_0 = arith.constant 0 : i32
    %c0_i32_1 = arith.constant 0 : i32
    return %c0_i32, %c0_i32_0 : i32, i32
  }
  func.func @transform_2(%arg0: i32) -> (i32, i32) {
    %c0_i32 = arith.constant 0 : i32
    %c0_i32_0 = arith.constant 0 : i32
    %c0_i32_1 = arith.constant 0 : i32
    return %c0_i32, %c0_i32_0 : i32, i32
  }
  func.func @transform_3(%arg0: i32) -> (i32, i32) {
    %c0_i32 = arith.constant 0 : i32
    %c0_i32_0 = arith.constant 0 : i32
    %c0_i32_1 = arith.constant 0 : i32
    return %c0_i32, %c0_i32_0 : i32, i32
  }
  func.func @transform_4(%arg0: i32) -> (i32, i32) {
    %c0_i32 = arith.constant 0 : i32
    %c0_i32_0 = arith.constant 0 : i32
    %c0_i32_1 = arith.constant 0 : i32
    return %c0_i32, %c0_i32_0 : i32, i32
  }
  func.func @transform_5(%arg0: i32) -> (i32, i32) {
    %c0_i32 = arith.constant 0 : i32
    %c0_i32_0 = arith.constant 0 : i32
    %c0_i32_1 = arith.constant 0 : i32
    return %c0_i32, %c0_i32_0 : i32, i32
  }
  func.func @transform_6(%arg0: i32) -> (i32, i32) {
    %c0_i32 = arith.constant 0 : i32
    %c0_i32_0 = arith.constant 0 : i32
    %c0_i32_1 = arith.constant 0 : i32
    return %c0_i32, %c0_i32_0 : i32, i32
  }
  func.func @transform_7(%arg0: i32) -> (i32, i32) {
    %c0_i32 = arith.constant 0 : i32
    %c0_i32_0 = arith.constant 0 : i32
    %c0_i32_1 = arith.constant 0 : i32
    return %c0_i32, %c0_i32_0 : i32, i32
  }
  func.func @transform_8(%arg0: i32) -> (i32, i32) {
    %c0_i32 = arith.constant 0 : i32
    %c0_i32_0 = arith.constant 0 : i32
    %c0_i32_1 = arith.constant 0 : i32
    return %c0_i32, %c0_i32_0 : i32, i32
  }
  func.func @transform_9(%arg0: i32) -> (i32, i32) {
    %c0_i32 = arith.constant 0 : i32
    %c0_i32_0 = arith.constant 0 : i32
    return %arg0, %c0_i32 : i32, i32
  }
}

</mosaic_0001>

<llo_original>
// kernel: nnwd_forward.1
$region0: #{nnwd_forward.1}
  #allocation0 [shape = 'u32[]', space=smem, size = 0x4, offset = 0x4, fixed_abs, tag = 'smem constant byte address 0x4 - core index']
  #allocation1 [shape = 'u32[72,128]{1,0:T(1,128)}', space=vmem, size = 0x9000, scoped, tag = 'internal scratch']
  %s0 = inlined_call_operand.vmem [shape: f32[16,32], index: 0, kind: input, shape index: {}]
  %s1 = inlined_call_operand.hbm [shape: f32[32,384], index: 1, kind: input, shape index: {}]
  %s2 = inlined_call_operand.vmem [shape: f32[1,384], index: 2, kind: input, shape index: {}]
  %s3 = inlined_call_operand.hbm [shape: f32[384,128], index: 3, kind: input, shape index: {}]
  %s4 = inlined_call_operand.vmem [shape: f32[1,128], index: 4, kind: input, shape index: {}]
  %s5 = inlined_call_operand.hbm [shape: f32[128,128], index: 5, kind: input, shape index: {}]
  %s6 = inlined_call_operand.vmem [shape: f32[1,128], index: 6, kind: input, shape index: {}]
  %s7 = inlined_call_operand.hbm [shape: f32[128,128], index: 7, kind: input, shape index: {}]
  %s8 = inlined_call_operand.vmem [shape: f32[1,128], index: 8, kind: input, shape index: {}]
  %s9 = inlined_call_operand.vmem [shape: f32[16,128], index: 9, kind: output, shape index: {}]
  %s10 = sld [smem:[#allocation0]]
  $region62: #{nnwd_forward.1} parent=0
    _
  %s12 = ssub.s32 1, %s10
  %s13 = scalar_select 0, %s12, %s10
  $region1: #{nnwd_forward.1} parent=0
    #allocation2 [shape = 'u8[49152]{0}', space=vmem, size = 0xc000, scoped, tag = 'input window, operand 1, single buffered']
    #allocation3 [shape = 's32[1]{0}', space=sflag, size = 0x4, scoped, tag = 'scoped memory for nnwd_forward.1']
    #allocation4 [shape = 'u8[196608]{0}', space=vmem, size = 0x30000, scoped, tag = 'input window, operand 3, single buffered']
    #allocation5 [shape = 's32[1]{0}', space=sflag, size = 0x4, scoped, tag = 'scoped memory for nnwd_forward.1']
    #allocation6 [shape = 'u8[65536]{0}', space=vmem, size = 0x10000, scoped, tag = 'input window, operand 5, single buffered']
    #allocation7 [shape = 'u8[65536]{0}', space=vmem, size = 0x10000, scoped, tag = 'input window, operand 7, single buffered']
    #allocation8 [shape = 's32[1]{0}', space=sflag, size = 0x4, scoped, tag = 'scoped memory for nnwd_forward.1']
    %14 = vsyncpa [#allocation3], 0
    %15 = vsyncpa [#allocation5], 0
    %16 = vsyncpa [#allocation8], 0
    // Predicated region
    $region2: #{nnwd_forward.1} parent=1 // pred_check
      _
    $region3: #{nnwd_forward.1} parent=1 // pred_check_branch
      %18 = sbr.rel (0) target = $region5
    $region4: #{nnwd_forward.1} parent=1 // pred_region
      _
    $region5: #{nnwd_forward.1} parent=1 // pred_fallthru
      _
    // Predicated region
    $region6: #{nnwd_forward.1} parent=1 // pred_check
      _
    $region7: #{nnwd_forward.1} parent=1 // pred_check_branch
      %20 = sbr.rel (0) target = $region9
    $region8: #{nnwd_forward.1} parent=1 // pred_region
      %22 = vsyncadd [#allocation3], 0
      %s23 = sshll.u32 %s1, 4
      %s24 = int_to_ptr.hbm [resolvable:$true] %s23
      %s25 = sshll.u32 [#allocation2], 4
      %s26 = int_to_ptr.vmem [resolvable:$true] %s25
      %31 = dma.hbm_to_vmem [thread:$0]  %s24, 1536, %s26, [#allocation3], 384, 384, 24
    $region9: #{nnwd_forward.1} parent=1 // pred_fallthru
      _
    // Predicated region
    $region10: #{nnwd_forward.1} parent=1 // pred_check
      _
    $region11: #{nnwd_forward.1} parent=1 // pred_check_branch
      %33 = sbr.rel (0) target = $region13
    $region12: #{nnwd_forward.1} parent=1 // pred_region
      _
    $region13: #{nnwd_forward.1} parent=1 // pred_fallthru
      _
    // Predicated region
    $region14: #{nnwd_forward.1} parent=1 // pred_check
      _
    $region15: #{nnwd_forward.1} parent=1 // pred_check_branch
      %35 = sbr.rel (0) target = $region17
    $region16: #{nnwd_forward.1} parent=1 // pred_region
      %37 = vsyncadd [#allocation5], 0
      %s38 = sshll.u32 %s3, 4
      %s39 = int_to_ptr.hbm [resolvable:$true] %s38
      %s40 = sshll.u32 [#allocation4], 4
      %s41 = int_to_ptr.vmem [resolvable:$true] %s40
      %46 = dma.hbm_to_vmem [thread:$0]  %s39, 6144, %s41, [#allocation5], 128, 128, 8
    $region17: #{nnwd_forward.1} parent=1 // pred_fallthru
      _
    // Predicated region
    $region18: #{nnwd_forward.1} parent=1 // pred_check
      _
    $region19: #{nnwd_forward.1} parent=1 // pred_check_branch
      %48 = sbr.rel (0) target = $region21
    $region20: #{nnwd_forward.1} parent=1 // pred_region
      _
    $region21: #{nnwd_forward.1} parent=1 // pred_fallthru
      _
    // Predicated region
    $region22: #{nnwd_forward.1} parent=1 // pred_check
      _
    $region23: #{nnwd_forward.1} parent=1 // pred_check_branch
      %50 = sbr.rel (0) target = $region25
    $region24: #{nnwd_forward.1} parent=1 // pred_region
      %52 = vsyncadd [#allocation5], 0
      %s53 = sshll.u32 %s5, 4
      %s54 = int_to_ptr.hbm [resolvable:$true] %s53
      %s55 = sshll.u32 [#allocation6], 4
      %s56 = int_to_ptr.vmem [resolvable:$true] %s55
      %61 = dma.hbm_to_vmem [thread:$0]  %s54, 2048, %s56, [#allocation5], 128, 128, 8
    $region25: #{nnwd_forward.1} parent=1 // pred_fallthru
      _
    // Predicated region
    $region26: #{nnwd_forward.1} parent=1 // pred_check
      _
    $region27: #{nnwd_forward.1} parent=1 // pred_check_branch
      %63 = sbr.rel (0) target = $region29
    $region28: #{nnwd_forward.1} parent=1 // pred_region
      _
    $region29: #{nnwd_forward.1} parent=1 // pred_fallthru
      _
    // Predicated region
    $region30: #{nnwd_forward.1} parent=1 // pred_check
      _
    $region31: #{nnwd_forward.1} parent=1 // pred_check_branch
      %65 = sbr.rel (0) target = $region33
    $region32: #{nnwd_forward.1} parent=1 // pred_region
      %67 = vsyncadd [#allocation8], 0
      %s68 = sshll.u32 %s7, 4
      %s69 = int_to_ptr.hbm [resolvable:$true] %s68
      %s70 = sshll.u32 [#allocation7], 4
      %s71 = int_to_ptr.vmem [resolvable:$true] %s70
      %76 = dma.hbm_to_vmem [thread:$0]  %s69, 2048, %s71, [#allocation8], 128, 128, 8
    $region33: #{nnwd_forward.1} parent=1 // pred_fallthru
      _
    // Predicated region
    $region34: #{nnwd_forward.1} parent=1 // pred_check
      _
    $region35: #{nnwd_forward.1} parent=1 // pred_check_branch
      %78 = sbr.rel (0) target = $region37
    $region36: #{nnwd_forward.1} parent=1 // pred_region
      _
    $region37: #{nnwd_forward.1} parent=1 // pred_fallthru
      _
    // Predicated region
    $region38: #{nnwd_forward.1} parent=1 // pred_check
      _
    $region39: #{nnwd_forward.1} parent=1 // pred_check_branch
      %80 = sbr.rel (0) target = $region41
    $region40: #{nnwd_forward.1} parent=1 // pred_region
      %82 = dma.done [#allocation3], 1536
    $region41: #{nnwd_forward.1} parent=1 // pred_fallthru
      _
    // Predicated region
    $region42: #{nnwd_forward.1} parent=1 // pred_check
      _
    $region43: #{nnwd_forward.1} parent=1 // pred_check_branch
      %84 = sbr.rel (0) target = $region45
    $region44: #{nnwd_forward.1} parent=1 // pred_region
      %86 = dma.done [#allocation5], 6144
    $region45: #{nnwd_forward.1} parent=1 // pred_fallthru
      _
    // Predicated region
    $region46: #{nnwd_forward.1} parent=1 // pred_check
      _
    $region47: #{nnwd_forward.1} parent=1 // pred_check_branch
      %88 = sbr.rel (0) target = $region49
    $region48: #{nnwd_forward.1} parent=1 // pred_region
      %90 = dma.done [#allocation5], 2048
    $region49: #{nnwd_forward.1} parent=1 // pred_fallthru
      _
    // Predicated region
    $region50: #{nnwd_forward.1} parent=1 // pred_check
      _
    $region51: #{nnwd_forward.1} parent=1 // pred_check_branch
      %92 = sbr.rel (0) target = $region53
    $region52: #{nnwd_forward.1} parent=1 // pred_region
      %94 = dma.done [#allocation8], 2048
    $region53: #{nnwd_forward.1} parent=1 // pred_fallthru
      _
    %v95 = vld [vmem:[%s0] sm:$0xff]
    %v96 = vld [vmem:[%s0 + $0x8] sm:$0xff]
    %v97 = vld [vmem:[#allocation2] sm:$0xff]
    %v98 = vld [vmem:[#allocation2 + $0x8] sm:$0xff]
    %v99 = vld [vmem:[#allocation2 + $0x10] sm:$0xff]
    %v100 = vld [vmem:[#allocation2 + $0x18] sm:$0xff]
    %v101 = vld [vmem:[#allocation2 + $0x20] sm:$0xff]
    %v102 = vld [vmem:[#allocation2 + $0x28] sm:$0xff]
    %v103 = vld [vmem:[#allocation2 + $0x30] sm:$0xff]
    %v104 = vld [vmem:[#allocation2 + $0x38] sm:$0xff]
    %v105 = vld [vmem:[#allocation2 + $0x40] sm:$0xff]
    %v106 = vld [vmem:[#allocation2 + $0x48] sm:$0xff]
    %v107 = vld [vmem:[#allocation2 + $0x50] sm:$0xff]
    %v108 = vld [vmem:[#allocation2 + $0x58] sm:$0xff]
    %v109 = vld [vmem:[%s2] sm:$0x7]
    %v111 = vperm.slane %v109, 0
    %v112 = vperm.slane %v109, 1
    %v113 = vperm.slane %v109, 2
    %vm117 = vcmask 261120
    %v119 = vsel %vm117, %v95, 0
    %v122 = vsel %vm117, %v96, 0
    %124 = vmatpush.msra.mxu0 0.0
    %125 = vmatpush.msra.mxu0 0.0
    %126 = vmatpush.msra.mxu0 0.0
    %127 = vmatpush.msra.mxu0 0.0
    %128 = vmatpush.msra.mxu0 0.0
    %129 = vmatpush.msra.mxu0 0.0
    %130 = vmatpush.msra.mxu0 0.0
    %131 = vmatpush.msra.mxu0 0.0
    %132 = vmatpush.msra.mxu0 0.0
    %133 = vmatpush.msra.mxu0 0.0
    %134 = vmatpush.msra.mxu0 0.0
    %135 = vmatpush.msra.mxu0 0.0
    %136 = vmatpush.msra.mxu0 %v106
    %137 = vmatpush.msra.mxu0 %v103
    %138 = vmatpush.msra.mxu0 %v100
    %139 = vmatpush.msra.mxu0 %v97
    %140 = vmatmul.f32.gmra.mxu0 %v119
    %v141 = vpop.f32.mrf.mxu0
    %v142 = vadd.f32 %v111, %v141
    %143 = vmatmul.f32.gmra.mxu0 %v122
    %v144 = vpop.f32.mrf.mxu0
    %v145 = vadd.f32 %v111, %v144
    %146 = vdwg.mxu0
    %147 = vmatpush.msra.mxu0 0.0
    %148 = vmatpush.msra.mxu0 0.0
    %149 = vmatpush.msra.mxu0 0.0
    %150 = vmatpush.msra.mxu0 0.0
    %151 = vmatpush.msra.mxu0 0.0
    %152 = vmatpush.msra.mxu0 0.0
    %153 = vmatpush.msra.mxu0 0.0
    %154 = vmatpush.msra.mxu0 0.0
    %155 = vmatpush.msra.mxu0 0.0
    %156 = vmatpush.msra.mxu0 0.0
    %157 = vmatpush.msra.mxu0 0.0
    %158 = vmatpush.msra.mxu0 0.0
    %159 = vmatpush.msra.mxu0 %v107
    %160 = vmatpush.msra.mxu0 %v104
    %161 = vmatpush.msra.mxu0 %v101
    %162 = vmatpush.msra.mxu0 %v98
    %163 = vmatmul.f32.gmra.mxu0 %v119
    %v164 = vpop.f32.mrf.mxu0
    %v165 = vadd.f32 %v112, %v164
    %166 = vmatmul.f32.gmra.mxu0 %v122
    %v167 = vpop.f32.mrf.mxu0
    %v168 = vadd.f32 %v112, %v167
    %169 = vdwg.mxu0
    %170 = vmatpush.msra.mxu0 0.0
    %171 = vmatpush.msra.mxu0 0.0
    %172 = vmatpush.msra.mxu0 0.0
    %173 = vmatpush.msra.mxu0 0.0
    %174 = vmatpush.msra.mxu0 0.0
    %175 = vmatpush.msra.mxu0 0.0
    %176 = vmatpush.msra.mxu0 0.0
    %177 = vmatpush.msra.mxu0 0.0
    %178 = vmatpush.msra.mxu0 0.0
    %179 = vmatpush.msra.mxu0 0.0
    %180 = vmatpush.msra.mxu0 0.0
    %181 = vmatpush.msra.mxu0 0.0
    %182 = vmatpush.msra.mxu0 %v108
    %183 = vmatpush.msra.mxu0 %v105
    %184 = vmatpush.msra.mxu0 %v102
    %185 = vmatpush.msra.mxu0 %v99
    %186 = vmatmul.f32.gmra.mxu0 %v119
    %v187 = vpop.f32.mrf.mxu0
    %v188 = vadd.f32 %v113, %v187
    %189 = vmatmul.f32.gmra.mxu0 %v122
    %v190 = vpop.f32.mrf.mxu0
    %v191 = vadd.f32 %v113, %v190
    %192 = vdwg.mxu0
    %v193 = vmax.f32 %v142, 0.0
    %v194 = vmax.f32 %v165, 0.0
    %v195 = vmax.f32 %v188, 0.0
    %v196 = vmax.f32 %v145, 0.0
    %v197 = vmax.f32 %v168, 0.0
    %v198 = vmax.f32 %v191, 0.0
    %v199 = vld [vmem:[#allocation4] sm:$0xff]
    %v200 = vld [vmem:[#allocation4 + $0x8] sm:$0xff]
    %v201 = vld [vmem:[#allocation4 + $0x10] sm:$0xff]
    %v202 = vld [vmem:[#allocation4 + $0x18] sm:$0xff]
    %v203 = vld [vmem:[#allocation4 + $0x20] sm:$0xff]
    %v204 = vld [vmem:[#allocation4 + $0x28] sm:$0xff]
    %v205 = vld [vmem:[#allocation4 + $0x30] sm:$0xff]
    %v206 = vld [vmem:[#allocation4 + $0x38] sm:$0xff]
    %v207 = vld [vmem:[#allocation4 + $0x40] sm:$0xff]
    %v208 = vld [vmem:[#allocation4 + $0x48] sm:$0xff]
    %v209 = vld [vmem:[#allocation4 + $0x50] sm:$0xff]
    %v210 = vld [vmem:[#allocation4 + $0x58] sm:$0xff]
    %v211 = vld [vmem:[#allocation4 + $0x60] sm:$0xff]
    %v212 = vld [vmem:[#allocation4 + $0x68] sm:$0xff]
    %v213 = vld [vmem:[#allocation4 + $0x70] sm:$0xff]
    %v214 = vld [vmem:[#allocation4 + $0x78] sm:$0xff]
    %v215 = vld [vmem:[#allocation4 + $0x80] sm:$0xff]
    %v216 = vld [vmem:[#allocation4 + $0x88] sm:$0xff]
    %v217 = vld [vmem:[#allocation4 + $0x90] sm:$0xff]
    %v218 = vld [vmem:[#allocation4 + $0x98] sm:$0xff]
    %v219 = vld [vmem:[#allocation4 + $0xa0] sm:$0xff]
    %v220 = vld [vmem:[#allocation4 + $0xa8] sm:$0xff]
    %v221 = vld [vmem:[#allocation4 + $0xb0] sm:$0xff]
    %v222 = vld [vmem:[#allocation4 + $0xb8] sm:$0xff]
    %v223 = vld [vmem:[#allocation4 + $0xc0] sm:$0xff]
    %v224 = vld [vmem:[#allocation4 + $0xc8] sm:$0xff]
    %v225 = vld [vmem:[#allocation4 + $0xd0] sm:$0xff]
    %v226 = vld [vmem:[#allocation4 + $0xd8] sm:$0xff]
    %v227 = vld [vmem:[#allocation4 + $0xe0] sm:$0xff]
    %v228 = vld [vmem:[#allocation4 + $0xe8] sm:$0xff]
    %v229 = vld [vmem:[#allocation4 + $0xf0] sm:$0xff]
    %v230 = vld [vmem:[#allocation4 + $0xf8] sm:$0xff]
    %v231 = vld [vmem:[#allocation4 + $0x100] sm:$0xff]
    %v232 = vld [vmem:[#allocation4 + $0x108] sm:$0xff]
    %v233 = vld [vmem:[#allocation4 + $0x110] sm:$0xff]
    %v234 = vld [vmem:[#allocation4 + $0x118] sm:$0xff]
    %v235 = vld [vmem:[#allocation4 + $0x120] sm:$0xff]
    %v236 = vld [vmem:[#allocation4 + $0x128] sm:$0xff]
    %v237 = vld [vmem:[#allocation4 + $0x130] sm:$0xff]
    %v238 = vld [vmem:[#allocation4 + $0x138] sm:$0xff]
    %v239 = vld [vmem:[#allocation4 + $0x140] sm:$0xff]
    %v240 = vld [vmem:[#allocation4 + $0x148] sm:$0xff]
    %v241 = vld [vmem:[#allocation4 + $0x150] sm:$0xff]
    %v242 = vld [vmem:[#allocation4 + $0x158] sm:$0xff]
    %v243 = vld [vmem:[#allocation4 + $0x160] sm:$0xff]
    %v244 = vld [vmem:[#allocation4 + $0x168] sm:$0xff]
    %v245 = vld [vmem:[#allocation4 + $0x170] sm:$0xff]
    %v246 = vld [vmem:[#allocation4 + $0x178] sm:$0xff]
    %v247 = vld [vmem:[%s4] sm:$0x1]
    %v249 = vperm.slane %v247, 0
    %251 = vmatpush.msra.mxu0 %v214
    %252 = vmatpush.msra.mxu0 %v213
    %253 = vmatpush.msra.mxu0 %v212
    %254 = vmatpush.msra.mxu0 %v211
    %255 = vmatpush.msra.mxu0 %v210
    %256 = vmatpush.msra.mxu0 %v209
    %257 = vmatpush.msra.mxu0 %v208
    %258 = vmatpush.msra.mxu0 %v207
    %259 = vmatpush.msra.mxu0 %v206
    %260 = vmatpush.msra.mxu0 %v205
    %261 = vmatpush.msra.mxu0 %v204
    %262 = vmatpush.msra.mxu0 %v203
    %263 = vmatpush.msra.mxu0 %v202
    %264 = vmatpush.msra.mxu0 %v201
    %265 = vmatpush.msra.mxu0 %v200
    %266 = vmatpush.msra.mxu0 %v199
    %267 = vmatmul.f32.gmra.mxu0 %v193
    %v268 = vpop.f32.mrf.mxu0
    %v269 = vadd.f32 %v249, %v268
    %270 = vmatmul.f32.gmra.mxu0 %v196
    %v271 = vpop.f32.mrf.mxu0
    %v272 = vadd.f32 %v249, %v271
    %273 = vdwg.mxu0
    %274 = vmatpush.msra.mxu0 %v230
    %275 = vmatpush.msra.mxu0 %v229
    %276 = vmatpush.msra.mxu0 %v228
    %277 = vmatpush.msra.mxu0 %v227
    %278 = vmatpush.msra.mxu0 %v226
    %279 = vmatpush.msra.mxu0 %v225
    %280 = vmatpush.msra.mxu0 %v224
    %281 = vmatpush.msra.mxu0 %v223
    %282 = vmatpush.msra.mxu0 %v222
    %283 = vmatpush.msra.mxu0 %v221
    %284 = vmatpush.msra.mxu0 %v220
    %285 = vmatpush.msra.mxu0 %v219
    %286 = vmatpush.msra.mxu0 %v218
    %287 = vmatpush.msra.mxu0 %v217
    %288 = vmatpush.msra.mxu0 %v216
    %289 = vmatpush.msra.mxu0 %v215
    %290 = vmatmul.f32.gmra.mxu0 %v194
    %v291 = vpop.f32.mrf.mxu0
    %v292 = vadd.f32 %v269, %v291
    %293 = vmatmul.f32.gmra.mxu0 %v197
    %v294 = vpop.f32.mrf.mxu0
    %v295 = vadd.f32 %v272, %v294
    %296 = vdwg.mxu0
    %297 = vmatpush.msra.mxu0 %v246
    %298 = vmatpush.msra.mxu0 %v245
    %299 = vmatpush.msra.mxu0 %v244
    %300 = vmatpush.msra.mxu0 %v243
    %301 = vmatpush.msra.mxu0 %v242
    %302 = vmatpush.msra.mxu0 %v241
    %303 = vmatpush.msra.mxu0 %v240
    %304 = vmatpush.msra.mxu0 %v239
    %305 = vmatpush.msra.mxu0 %v238
    %306 = vmatpush.msra.mxu0 %v237
    %307 = vmatpush.msra.mxu0 %v236
    %308 = vmatpush.msra.mxu0 %v235
    %309 = vmatpush.msra.mxu0 %v234
    %310 = vmatpush.msra.mxu0 %v233
    %311 = vmatpush.msra.mxu0 %v232
    %312 = vmatpush.msra.mxu0 %v231
    %313 = vmatmul.f32.gmra.mxu0 %v195
    %v314 = vpop.f32.mrf.mxu0
    %v315 = vadd.f32 %v292, %v314
    %316 = vmatmul.f32.gmra.mxu0 %v198
    %v317 = vpop.f32.mrf.mxu0
    %v318 = vadd.f32 %v295, %v317
    %319 = vdwg.mxu0
    %v320 = vmax.f32 %v315, 0.0
    %v321 = vmax.f32 %v318, 0.0
    %v322 = vld [vmem:[#allocation6] sm:$0xff]
    %v323 = vld [vmem:[#allocation6 + $0x8] sm:$0xff]
    %v324 = vld [vmem:[#allocation6 + $0x10] sm:$0xff]
    %v325 = vld [vmem:[#allocation6 + $0x18] sm:$0xff]
    %v326 = vld [vmem:[#allocation6 + $0x20] sm:$0xff]
    %v327 = vld [vmem:[#allocation6 + $0x28] sm:$0xff]
    %v328 = vld [vmem:[#allocation6 + $0x30] sm:$0xff]
    %v329 = vld [vmem:[#allocation6 + $0x38] sm:$0xff]
    %v330 = vld [vmem:[#allocation6 + $0x40] sm:$0xff]
    %v331 = vld [vmem:[#allocation6 + $0x48] sm:$0xff]
    %v332 = vld [vmem:[#allocation6 + $0x50] sm:$0xff]
    %v333 = vld [vmem:[#allocation6 + $0x58] sm:$0xff]
    %v334 = vld [vmem:[#allocation6 + $0x60] sm:$0xff]
    %v335 = vld [vmem:[#allocation6 + $0x68] sm:$0xff]
    %v336 = vld [vmem:[#allocation6 + $0x70] sm:$0xff]
    %v337 = vld [vmem:[#allocation6 + $0x78] sm:$0xff]
    %v338 = vld [vmem:[%s6] sm:$0x1]
    %v340 = vperm.slane %v338, 0
    %342 = vmatpush.msra.mxu0 %v337
    %343 = vmatpush.msra.mxu0 %v336
    %344 = vmatpush.msra.mxu0 %v335
    %345 = vmatpush.msra.mxu0 %v334
    %346 = vmatpush.msra.mxu0 %v333
    %347 = vmatpush.msra.mxu0 %v332
    %348 = vmatpush.msra.mxu0 %v331
    %349 = vmatpush.msra.mxu0 %v330
    %350 = vmatpush.msra.mxu0 %v329
    %351 = vmatpush.msra.mxu0 %v328
    %352 = vmatpush.msra.mxu0 %v327
    %353 = vmatpush.msra.mxu0 %v326
    %354 = vmatpush.msra.mxu0 %v325
    %355 = vmatpush.msra.mxu0 %v324
    %356 = vmatpush.msra.mxu0 %v323
    %357 = vmatpush.msra.mxu0 %v322
    %358 = vmatmul.f32.gmra.mxu0 %v320
    %v359 = vpop.f32.mrf.mxu0
    %v360 = vadd.f32 %v340, %v359
    %361 = vmatmul.f32.gmra.mxu0 %v321
    %v362 = vpop.f32.mrf.mxu0
    %v363 = vadd.f32 %v340, %v362
    %364 = vdwg.mxu0
    %v365 = vmax.f32 %v360, 0.0
    %v366 = vmax.f32 %v363, 0.0
    %v367 = vld [vmem:[#allocation7] sm:$0xff]
    %v368 = vld [vmem:[#allocation7 + $0x8] sm:$0xff]
    %v369 = vld [vmem:[#allocation7 + $0x10] sm:$0xff]
    %v370 = vld [vmem:[#allocation7 + $0x18] sm:$0xff]
    %v371 = vld [vmem:[#allocation7 + $0x20] sm:$0xff]
    %v372 = vld [vmem:[#allocation7 + $0x28] sm:$0xff]
    %v373 = vld [vmem:[#allocation7 + $0x30] sm:$0xff]
    %v374 = vld [vmem:[#allocation7 + $0x38] sm:$0xff]
    %v375 = vld [vmem:[#allocation7 + $0x40] sm:$0xff]
    %v376 = vld [vmem:[#allocation7 + $0x48] sm:$0xff]
    %v377 = vld [vmem:[#allocation7 + $0x50] sm:$0xff]
    %v378 = vld [vmem:[#allocation7 + $0x58] sm:$0xff]
    %v379 = vld [vmem:[#allocation7 + $0x60] sm:$0xff]
    %v380 = vld [vmem:[#allocation7 + $0x68] sm:$0xff]
    %v381 = vld [vmem:[#allocation7 + $0x70] sm:$0xff]
    %v382 = vld [vmem:[#allocation7 + $0x78] sm:$0xff]
    %v383 = vld [vmem:[%s8] sm:$0x1]
    %v385 = vperm.slane %v383, 0
    %387 = vmatpush.msra.mxu0 %v382
    %388 = vmatpush.msra.mxu0 %v381
    %389 = vmatpush.msra.mxu0 %v380
    %390 = vmatpush.msra.mxu0 %v379
    %391 = vmatpush.msra.mxu0 %v378
    %392 = vmatpush.msra.mxu0 %v377
    %393 = vmatpush.msra.mxu0 %v376
    %394 = vmatpush.msra.mxu0 %v375
    %395 = vmatpush.msra.mxu0 %v374
    %396 = vmatpush.msra.mxu0 %v373
    %397 = vmatpush.msra.mxu0 %v372
    %398 = vmatpush.msra.mxu0 %v371
    %399 = vmatpush.msra.mxu0 %v370
    %400 = vmatpush.msra.mxu0 %v369
    %401 = vmatpush.msra.mxu0 %v368
    %402 = vmatpush.msra.mxu0 %v367
    %403 = vmatmul.f32.gmra.mxu0 %v365
    %v404 = vpop.f32.mrf.mxu0
    %v405 = vadd.f32 %v385, %v404
    %406 = vmatmul.f32.gmra.mxu0 %v366
    %v407 = vpop.f32.mrf.mxu0
    %v408 = vadd.f32 %v385, %v407
    %409 = vdwg.mxu0
    %410 = vst [vmem:[%s9] sm:$0xff] %v405
    %411 = vst [vmem:[%s9 + $0x8] sm:$0xff] %v408
    // Predicated region
    $region54: #{nnwd_forward.1} parent=1 // pred_check
      _
    $region55: #{nnwd_forward.1} parent=1 // pred_check_branch
      %413 = sbr.rel (0) target = $region57
    $region56: #{nnwd_forward.1} parent=1 // pred_region
      _
    $region57: #{nnwd_forward.1} parent=1 // pred_fallthru
      _
    // Predicated region
    $region58: #{nnwd_forward.1} parent=1 // pred_check
      _
    $region59: #{nnwd_forward.1} parent=1 // pred_check_branch
      %415 = sbr.rel (0) target = $region61
    $region60: #{nnwd_forward.1} parent=1 // pred_region
      _
    $region61: #{nnwd_forward.1} parent=1 // pred_fallthru
      _
    %416 = vsyncpa [#allocation3], 1
    %417 = vsyncpa [#allocation5], 1
    %418 = vsyncpa [#allocation8], 1

</llo_original>
